<compile_context>
chip_gen: v5e
topology: v5e:2x2
jax: 0.10.0
libtpu: 0.0.40
codegen_flags: <defaults>
</compile_context>

<pallas_src>
import functools

import numpy as np
import jax
import jax.numpy as jnp
from jax.experimental import pallas as pl
from jax.experimental.pallas import tpu as pltpu


def _round_up(x, m):
    return ((x + m - 1) // m) * m


# ----------------------------------------------------------------------------
# Pallas kernel: fused whole-network forward (all layers, single launch, no grid)
# ----------------------------------------------------------------------------
def _generator_fused_kernel(z_ref, a0_ref, a_ref, s_ref, o_ref, *, n_layers, acts):
    """z_ref: (B_pad, latent_pad) f32, a0_ref: (latent_pad, D_pad) bf16,
    a_ref: (max(n_layers-1,1), D_pad, D_pad) bf16, s_ref: (n_layers, 1, D_pad) f32,
    o_ref: (B_pad, D_pad) f32.  Statically unrolled layer chain."""
    x = z_ref[...]                                            # f32
    for i in range(n_layers):
        a = a0_ref[...] if i == 0 else a_ref[i - 1]           # bf16 weight tile
        # MXU: bf16 x bf16 -> f32 accumulation.
        y = jnp.dot(x.astype(jnp.bfloat16), a,
                    preferred_element_type=jnp.float32)
        y = y + s_ref[i]                                      # folded BN shift / bias
        if acts[i] == "relu":
            y = jnp.maximum(y, 0.0)
        else:                                                 # "tanh"
            y = jnp.tanh(y)
        x = y
    o_ref[...] = x.astype(o_ref.dtype)


def make_generator_forward(net, batch_size):
    """Build a jitted forward: z (B, latent) f32 -> padded output (B_pad, D_pad) f32."""
    A0 = net["A0"]                       # (latent_pad, D_pad) bf16
    A_stack = net["A_stack"]             # (max(n_layers-1,1), D_pad, D_pad) bf16
    S_stack = net["S_stack"]             # (n_layers, 1, D_pad) f32
    acts = net["acts"]
    n_layers = len(acts)
    latent = net["latent"]
    latent_pad = net["latent_pad"]
    D_pad = net["D_pad"]

    B = batch_size
    B_pad = _round_up(B, 16)             # valid f32(8)/bf16(16) sublane tiling

    flops = (2 * B_pad * latent_pad * D_pad
             + 2 * B_pad * D_pad * D_pad * max(n_layers - 1, 0))
    bytes_accessed = (B_pad * latent_pad * 4 + A0.size * 2 + A_stack.size * 2
                      + S_stack.size * 4 + B_pad * D_pad * 4)

    kernel = functools.partial(_generator_fused_kernel, n_layers=n_layers, acts=acts)
    vmem_spec = pl.BlockSpec(memory_space=pltpu.MemorySpace.VMEM)

    call = pl.pallas_call(
        kernel,
        out_shape=jax.ShapeDtypeStruct((B_pad, D_pad), jnp.float32),
        in_specs=[vmem_spec, vmem_spec, vmem_spec, vmem_spec],
        out_specs=vmem_spec,
        cost_estimate=pl.CostEstimate(flops=int(flops),
                                      transcendentals=int(B_pad * D_pad),
                                      bytes_accessed=int(bytes_accessed)),
    )

    @jax.jit
    def forward(z):
        # Only the batch rows need padding (latent lanes already match latent_pad,
        # or get a tiny zero-pad); padded rows stay 0 through every layer's ReLU/Tanh
        # because padded A rows/cols and shift lanes are 0.
        if B_pad != B or latent_pad != latent:
            z_in = jnp.zeros((B_pad, latent_pad), jnp.float32)
            z_in = z_in.at[:B, :latent].set(z.astype(jnp.float32))
        else:
            z_in = z.astype(jnp.float32)
        return call(z_in, A0, A_stack, S_stack)

    return forward, B_pad


# ----------------------------------------------------------------------------
# Glue: ConvTranspose1d as a scatter matrix over the flattened NCL layout
# ----------------------------------------------------------------------------
def build_scatter_matrix(W, L_in, stride, pad):
    """W: (C_in, C_out, K) -> A: (C_in*L_in, C_out*L_out), plus L_out."""
    C_in, C_out, K = W.shape
    L_out = (L_in - 1) * stride - 2 * pad + K
    A4 = np.zeros((C_in, L_in, C_out, L_out), dtype=np.float32)
    for l in range(L_in):
        for k in range(K):
            t = l * stride - pad + k
            if 0 <= t < L_out:
                A4[:, l, :, t] += W[:, :, k]
    return A4.reshape(C_in * L_in, C_out * L_out), L_out


# ----------------------------------------------------------------------------
# Parameter construction (deterministic), mirroring Generator_1D.__init__
# ----------------------------------------------------------------------------
def build_generator_params(key, latent_shape, deconv_sizes, scenario_shape):
    full = [(latent_shape,)] + list(deconv_sizes) + [(scenario_shape[0], 1, 5, 3, 1)]

    layer_cfgs = []  # (c_in, c_out, K, S, P)
    for prev, curr in zip(full, full[1:]):
        c_prev = prev[0]
        c_out, n_blocks, K, S, P = curr
        for b in range(n_blocks):
            c_in = c_prev if b == 0 else c_out
            layer_cfgs.append((c_in, c_out, K, S, P))

    n_layers = len(layer_cfgs)
    layers = []        # raw per-layer params (for the numpy reference)
    L = 1              # latent vector viewed as (B, latent, 1)

    # ---- pass 1: raw scatter matrices, folded BN scale/shift ----
    for idx, (c_in, c_out, K, S, P) in enumerate(layer_cfgs):
        key, kw, kb, kg, kbe, km, kv = jax.random.split(key, 7)
        is_last = idx == n_layers - 1

        # DCGAN init: N(0, 0.02)
        W = 0.02 * np.asarray(jax.random.normal(kw, (c_in, c_out, K)), dtype=np.float32)
        A, L_out = build_scatter_matrix(W, L, S, P)

        if not is_last:
            # ConvTranspose1d(bias=False) -> BatchNorm1d (eval) -> ReLU
            gamma = 1.0 + 0.1 * np.asarray(jax.random.normal(kg, (c_out,)), np.float32)
            beta = 0.05 * np.asarray(jax.random.normal(kbe, (c_out,)), np.float32)
            r_mean = 0.02 * np.asarray(jax.random.normal(km, (c_out,)), np.float32)
            r_var = 1.0 + 0.1 * np.abs(np.asarray(jax.random.normal(kv, (c_out,)), np.float32))
            inv_std = 1.0 / np.sqrt(r_var + 1e-5)
            scale_c = gamma * inv_std
            shift_c = beta - r_mean * scale_c
            act = "relu"
            bias = None
        else:
            # final ConvTranspose1d(bias=True) -> Tanh
            bias = 0.01 * np.asarray(jax.random.normal(kb, (c_out,)), np.float32)
            scale_c = np.ones((c_out,), np.float32)
            shift_c = bias.copy()
            act = "tanh"
            gamma = beta = r_mean = r_var = None

        layers.append(dict(
            W=W, bias=bias, stride=S, pad=P, L_in=L, L_out=L_out,
            c_in=c_in, c_out=c_out, act=act,
            gamma=gamma, beta=beta, r_mean=r_mean, r_var=r_var,
            A=A, scale_c=scale_c, shift_c=shift_c,
        ))
        L = L_out

    # ---- pass 2: uniform lane-dense padding + stacking ----
    latent_pad = _round_up(latent_shape, 8)                       # A_0 rows / z lanes
    D_pad = _round_up(max(p["c_out"] * p["L_out"] for p in layers), 128)

    A0_pad = np.zeros((latent_pad, D_pad), np.float32)
    A_stack = np.zeros((max(n_layers - 1, 1), D_pad, D_pad), np.float32)
    S_stack = np.zeros((n_layers, 1, D_pad), np.float32)

    for idx, p in enumerate(layers):
        n_in = p["c_in"] * p["L_in"]
        n_out = p["c_out"] * p["L_out"]
        # Fold the per-channel BN scale into the scatter-matrix columns.
        A_scaled = p["A"] * np.repeat(p["scale_c"], p["L_out"])[None, :]
        if idx == 0:
            A0_pad[:n_in, :n_out] = A_scaled
        else:
            A_stack[idx - 1, :n_in, :n_out] = A_scaled
        # Per-channel shift repeated along L (channel-major NCL flatten); padded lanes 0.
        S_stack[idx, 0, :n_out] = np.repeat(p["shift_c"], p["L_out"])

    net = dict(
        A0=jnp.asarray(A0_pad).astype(jnp.bfloat16),
        A_stack=jnp.asarray(A_stack).astype(jnp.bfloat16),
        S_stack=jnp.asarray(S_stack),
        acts=tuple(p["act"] for p in layers),
        latent=latent_shape, latent_pad=latent_pad, D_pad=D_pad,
        c_out_last=layers[-1]["c_out"], L_last=layers[-1]["L_out"],
        layers=layers,
    )
    return net


# ----------------------------------------------------------------------------
# Pure-numpy reference (direct conv-transpose scatter) for correctness check
# ----------------------------------------------------------------------------
def conv_transpose1d_np(x, W, bias, stride, pad):
    B, C_in, L_in = x.shape
    _, C_out, K = W.shape
    L_out = (L_in - 1) * stride - 2 * pad + K
    y = np.zeros((B, C_out, L_out), dtype=np.float64)
    for b in range(B):
        for ci in range(C_in):
            for l in range(L_in):
                for co in range(C_out):
                    for k in range(K):
                        t = l * stride - pad + k
                        if 0 <= t < L_out:
                            y[b, co, t] += x[b, ci, l] * W[ci, co, k]
    if bias is not None:
        y += bias[None, :, None]
    return y


def reference_forward(z, layers):
    x = np.asarray(z, dtype=np.float64)[:, :, None]  # (B, latent, 1)
    for p in layers:
        x = conv_transpose1d_np(x, p["W"], p["bias"], p["stride"], p["pad"])
        if p["act"] == "relu":
            inv_std = 1.0 / np.sqrt(p["r_var"] + 1e-5)
            x = (x - p["r_mean"][None, :, None]) * inv_std[None, :, None]
            x = x * p["gamma"][None, :, None] + p["beta"][None, :, None]
            x = np.maximum(x, 0.0)
        else:
            x = np.tanh(x)
    return x


# ----------------------------------------------------------------------------
if __name__ == "__main__":
    # Small config consistent with the module's constructor.
    latent_shape = 32
    deconv_sizes = [(16, 1, 4, 2, 1), (8, 1, 4, 2, 1)]
    # lengths: 1 -> 2 -> 4 -> 12 ; final channels = scenario_shape[0]
    scenario_shape = (4, 12)
    B = 2

    key = jax.random.PRNGKey(0)
    key, kz = jax.random.split(key)
    net = build_generator_params(key, latent_shape, deconv_sizes, scenario_shape)

    z = jax.random.normal(kz, (B, latent_shape), dtype=jnp.float32)

    forward, B_pad = make_generator_forward(net, B)
    out_pad = jax.block_until_ready(forward(z))

    # Un-pad / reshape host-side (keeps the device graph free of a trailing slice op).
    C_last, L_last = net["c_out_last"], net["L_last"]
    out = np.asarray(out_pad)[:B, :C_last * L_last].reshape(B, C_last, L_last)

    assert out.shape == (B, scenario_shape[0], L_last), out.shape

    ref = reference_forward(np.asarray(z), net["layers"])
    # bf16 MXU inputs (f32 accumulation) -> slightly looser tolerance than an f32 path.
    assert np.allclose(out, ref, rtol=2e-2, atol=2e-2), (
        float(np.max(np.abs(out - ref)))
    )

    print("KERNEL_OK")
</pallas_src>

<mosaic_0001>
module attributes {stable_mosaic.version = 11 : i64} {
  func.func @_generator_fused_kernel(%arg0: memref<16x32xf32, #tpu.memory_space<vmem>>, %arg1: memref<32x128xbf16, #tpu.memory_space<vmem>>, %arg2: memref<2x128x128xbf16, #tpu.memory_space<vmem>>, %arg3: memref<3x1x128xf32, #tpu.memory_space<vmem>>, %arg4: memref<16x128xf32, #tpu.memory_space<vmem>>) attributes {dimension_semantics = [], scalar_prefetch = 0 : i64, scratch_operands = 0 : i64, tpu.core_type = #tpu.core_type<tc>} {
    %c0 = arith.constant 0 : index
    %c0_0 = arith.constant 0 : index
    %0 = vector.load %arg0[%c0, %c0_0] : memref<16x32xf32, #tpu.memory_space<vmem>>, vector<16x32xf32>
    %c0_1 = arith.constant 0 : index
    %c0_2 = arith.constant 0 : index
    %1 = vector.load %arg1[%c0_1, %c0_2] : memref<32x128xbf16, #tpu.memory_space<vmem>>, vector<32x128xbf16>
    %2 = arith.truncf %0 : vector<16x32xf32> to vector<16x32xbf16>
    %cst = arith.constant dense<0.000000e+00> : vector<16x128xf32>
    %3 = tpu.matmul %2, %1, %cst {dimension_numbers = #tpu.dot_dimension_numbers<[1], [0], [0], [1], [0, 0, 1, 1], [], []>} : vector<16x32xbf16>, vector<32x128xbf16>, vector<16x128xf32> -> vector<16x128xf32>
    %c0_3 = arith.constant 0 : index
    %c0_4 = arith.constant 0 : index
    %c0_5 = arith.constant 0 : index
    %4 = vector.load %arg3[%c0_3, %c0_4, %c0_5] : memref<3x1x128xf32, #tpu.memory_space<vmem>>, vector<1x1x128xf32>
    %5 = vector.shape_cast %4 : vector<1x1x128xf32> to vector<1x128xf32>
    %6 = vector.broadcast %5 : vector<1x128xf32> to vector<16x128xf32>
    %7 = arith.addf %3, %6 : vector<16x128xf32>
    %cst_6 = arith.constant 0.000000e+00 : f32
    %8 = vector.broadcast %cst_6 : f32 to vector<16x128xf32>
    %9 = arith.maximumf %7, %8 : vector<16x128xf32>
    %c0_7 = arith.constant 0 : index
    %c0_8 = arith.constant 0 : index
    %c0_9 = arith.constant 0 : index
    %10 = vector.load %arg2[%c0_7, %c0_8, %c0_9] : memref<2x128x128xbf16, #tpu.memory_space<vmem>>, vector<1x128x128xbf16>
    %11 = vector.shape_cast %10 : vector<1x128x128xbf16> to vector<128x128xbf16>
    %12 = arith.truncf %9 : vector<16x128xf32> to vector<16x128xbf16>
    %cst_10 = arith.constant dense<0.000000e+00> : vector<16x128xf32>
    %13 = tpu.matmul %12, %11, %cst_10 {dimension_numbers = #tpu.dot_dimension_numbers<[1], [0], [0], [1], [0, 0, 1, 1], [], []>} : vector<16x128xbf16>, vector<128x128xbf16>, vector<16x128xf32> -> vector<16x128xf32>
    %c1 = arith.constant 1 : index
    %c0_11 = arith.constant 0 : index
    %c0_12 = arith.constant 0 : index
    %14 = vector.load %arg3[%c1, %c0_11, %c0_12] : memref<3x1x128xf32, #tpu.memory_space<vmem>>, vector<1x1x128xf32>
    %15 = vector.shape_cast %14 : vector<1x1x128xf32> to vector<1x128xf32>
    %16 = vector.broadcast %15 : vector<1x128xf32> to vector<16x128xf32>
    %17 = arith.addf %13, %16 : vector<16x128xf32>
    %cst_13 = arith.constant 0.000000e+00 : f32
    %18 = vector.broadcast %cst_13 : f32 to vector<16x128xf32>
    %19 = arith.maximumf %17, %18 : vector<16x128xf32>
    %c1_14 = arith.constant 1 : index
    %c0_15 = arith.constant 0 : index
    %c0_16 = arith.constant 0 : index
    %20 = vector.load %arg2[%c1_14, %c0_15, %c0_16] : memref<2x128x128xbf16, #tpu.memory_space<vmem>>, vector<1x128x128xbf16>
    %21 = vector.shape_cast %20 : vector<1x128x128xbf16> to vector<128x128xbf16>
    %22 = arith.truncf %19 : vector<16x128xf32> to vector<16x128xbf16>
    %cst_17 = arith.constant dense<0.000000e+00> : vector<16x128xf32>
    %23 = tpu.matmul %22, %21, %cst_17 {dimension_numbers = #tpu.dot_dimension_numbers<[1], [0], [0], [1], [0, 0, 1, 1], [], []>} : vector<16x128xbf16>, vector<128x128xbf16>, vector<16x128xf32> -> vector<16x128xf32>
    %c2 = arith.constant 2 : index
    %c0_18 = arith.constant 0 : index
    %c0_19 = arith.constant 0 : index
    %24 = vector.load %arg3[%c2, %c0_18, %c0_19] : memref<3x1x128xf32, #tpu.memory_space<vmem>>, vector<1x1x128xf32>
    %25 = vector.shape_cast %24 : vector<1x1x128xf32> to vector<1x128xf32>
    %26 = vector.broadcast %25 : vector<1x128xf32> to vector<16x128xf32>
    %27 = arith.addf %23, %26 : vector<16x128xf32>
    %28 = math.tanh %27 : vector<16x128xf32>
    %c0_20 = arith.constant 0 : index
    %c0_21 = arith.constant 0 : index
    %29 = vector.load %arg4[%c0_20, %c0_21] : memref<16x128xf32, #tpu.memory_space<vmem>>, vector<16x128xf32>
    tpu.vector_store %arg4[%c0_20, %c0_21], %28 {strides = array<i32>} : memref<16x128xf32, #tpu.memory_space<vmem>>, vector<16x128xf32>,
    return
  }
}

</mosaic_0001>

<llo_original>
// kernel: forward.1
$region0: #{forward.1}
  #allocation0 [shape = 'u32[]', space=smem, size = 0x4, offset = 0x4, fixed_abs, tag = 'smem constant byte address 0x4 - core index']
  #allocation1 [shape = 'u32[72,128]{1,0:T(1,128)}', space=vmem, size = 0x9000, scoped, tag = 'internal scratch']
  %s0 = inlined_call_operand.vmem [shape: f32[16,32], index: 0, kind: input, shape index: {}]
  %s1 = inlined_call_operand.vmem [shape: bf16[32,128], index: 1, kind: input, shape index: {}]
  %s2 = inlined_call_operand.hbm [shape: bf16[2,128,128], index: 2, kind: input, shape index: {}]
  %s3 = inlined_call_operand.vmem [shape: f32[3,1,128], index: 3, kind: input, shape index: {}]
  %s4 = inlined_call_operand.hbm [shape: f32[16,128], index: 4, kind: output, shape index: {}]
  %s5 = sld [smem:[#allocation0]]
  $region30: #{forward.1} parent=0
    _
  %s7 = ssub.s32 1, %s5
  %s8 = scalar_select 0, %s7, %s5
  $region1: #{forward.1} parent=0
    #allocation2 [shape = 'u8[65536]{0}', space=vmem, size = 0x10000, scoped, tag = 'input window, operand 2, single buffered']
    #allocation3 [shape = 's32[1]{0}', space=sflag, size = 0x4, scoped, tag = 'scoped memory for forward.1']
    #allocation4 [shape = 's32[1]{0}', space=sflag, size = 0x4, scoped, tag = 'scoped memory for forward.1']
    #allocation5 [shape = 'u8[8192]{0}', space=vmem, size = 0x2000, scoped, tag = 'output window, operand 0, single buffered']
    %9 = vsyncpa [#allocation3], 0
    %10 = vsyncpa [#allocation4], 0
    // Predicated region
    $region2: #{forward.1} parent=1 // pred_check
      _
    $region3: #{forward.1} parent=1 // pred_check_branch
      %12 = sbr.rel (0) target = $region5
    $region4: #{forward.1} parent=1 // pred_region
      _
    $region5: #{forward.1} parent=1 // pred_fallthru
      _
    // Predicated region
    $region6: #{forward.1} parent=1 // pred_check
      _
    $region7: #{forward.1} parent=1 // pred_check_branch
      %14 = sbr.rel (0) target = $region9
    $region8: #{forward.1} parent=1 // pred_region
      _
    $region9: #{forward.1} parent=1 // pred_fallthru
      _
    // Predicated region
    $region10: #{forward.1} parent=1 // pred_check
      _
    $region11: #{forward.1} parent=1 // pred_check_branch
      %16 = sbr.rel (0) target = $region13
    $region12: #{forward.1} parent=1 // pred_region
      %18 = vsyncadd [#allocation3], 0
      %s19 = sshll.u32 %s2, 4
      %s20 = int_to_ptr.hbm [resolvable:$true] %s19
      %s21 = sshll.u32 [#allocation2], 4
      %s22 = int_to_ptr.vmem [resolvable:$true] %s21
      %27 = dma.hbm_to_vmem [thread:$0]  %s20, 2048, %s22, [#allocation3], 64, 64, 4
    $region13: #{forward.1} parent=1 // pred_fallthru
      _
    // Predicated region
    $region14: #{forward.1} parent=1 // pred_check
      _
    $region15: #{forward.1} parent=1 // pred_check_branch
      %29 = sbr.rel (0) target = $region17
    $region16: #{forward.1} parent=1 // pred_region
      _
    $region17: #{forward.1} parent=1 // pred_fallthru
      _
    // Predicated region
    $region18: #{forward.1} parent=1 // pred_check
      _
    $region19: #{forward.1} parent=1 // pred_check_branch
      %31 = sbr.rel (0) target = $region21
    $region20: #{forward.1} parent=1 // pred_region
      %33 = dma.done [#allocation3], 2048
    $region21: #{forward.1} parent=1 // pred_fallthru
      _
    %v35 = vld [vmem:[%s0] sm:$0xff]
    %v36 = vld [vmem:[%s0 + $0x8] sm:$0xff]
    %v37 = vld [vmem:[%s1] sm:$0xf]
    %v38 = vld [vmem:[%s1 + $0x4] sm:$0xf]
    %v39 = vld [vmem:[%s1 + $0x8] sm:$0xf]
    %v40 = vld [vmem:[%s1 + $0xc] sm:$0xf]
    %v41 = vpack.c.bf16 %v36, %v35
    %v42 = vld [vmem:[%s3] sm:$0x1]
    %v44 = vperm.slane %v42, 0
    %v50 = vunpack.c.l.b16 %v37
    %v51 = vunpack.c.l.b16 %v38
    %v52 = vunpack.c.l.b16 %v39
    %v53 = vunpack.c.l.b16 %v40
    %v54 = vpack.c.b16 %v51, %v50
    %v55 = vpack.c.b16 %v53, %v52
    %vm58 = vcmask 261120
    %v60 = vsel %vm58, %v41, 0
    %62 = vmatpush.bf16.msra.mxu0 0
    %63 = vmatpush.bf16.msra.mxu0 0
    %64 = vmatpush.bf16.msra.mxu0 0
    %65 = vmatpush.bf16.msra.mxu0 0
    %66 = vmatpush.bf16.msra.mxu0 0
    %67 = vmatpush.bf16.msra.mxu0 0
    %68 = vmatpush.bf16.msra.mxu0 %v55
    %69 = vmatpush.bf16.msra.mxu0 %v54
    %70 = vmatmul.bf16.gmra.mxu0 %v60
    %v71 = vpop.f32.mrf.mxu0
    %v72 = vadd.f32 %v44, %v71
    %v73 = vpop.f32.mrf.mxu0
    %v74 = vadd.f32 %v44, %v73
    %75 = vdwg.mxu0
    %v76 = vmax.f32 %v72, 0.0
    %v77 = vmax.f32 %v74, 0.0
    %v78 = vld [vmem:[#allocation2] sm:$0xf]
    %v79 = vld [vmem:[#allocation2 + $0x4] sm:$0xf]
    %v80 = vld [vmem:[#allocation2 + $0x8] sm:$0xf]
    %v81 = vld [vmem:[#allocation2 + $0xc] sm:$0xf]
    %v82 = vld [vmem:[#allocation2 + $0x10] sm:$0xf]
    %v83 = vld [vmem:[#allocation2 + $0x14] sm:$0xf]
    %v84 = vld [vmem:[#allocation2 + $0x18] sm:$0xf]
    %v85 = vld [vmem:[#allocation2 + $0x1c] sm:$0xf]
    %v86 = vld [vmem:[#allocation2 + $0x20] sm:$0xf]
    %v87 = vld [vmem:[#allocation2 + $0x24] sm:$0xf]
    %v88 = vld [vmem:[#allocation2 + $0x28] sm:$0xf]
    %v89 = vld [vmem:[#allocation2 + $0x2c] sm:$0xf]
    %v90 = vld [vmem:[#allocation2 + $0x30] sm:$0xf]
    %v91 = vld [vmem:[#allocation2 + $0x34] sm:$0xf]
    %v92 = vld [vmem:[#allocation2 + $0x38] sm:$0xf]
    %v93 = vld [vmem:[#allocation2 + $0x3c] sm:$0xf]
    %v94 = vpack.c.bf16 %v77, %v76
    %s95 = scalar_lea.vmem %s3, 1
    %v96 = vld [vmem:[%s95] sm:$0x1]
    %v98 = vperm.slane %v96, 0
    %v116 = vunpack.c.l.b16 %v78
    %v117 = vunpack.c.l.b16 %v79
    %v118 = vunpack.c.l.b16 %v80
    %v119 = vunpack.c.l.b16 %v81
    %v120 = vunpack.c.l.b16 %v82
    %v121 = vunpack.c.l.b16 %v83
    %v122 = vunpack.c.l.b16 %v84
    %v123 = vunpack.c.l.b16 %v85
    %v124 = vunpack.c.l.b16 %v86
    %v125 = vunpack.c.l.b16 %v87
    %v126 = vunpack.c.l.b16 %v88
    %v127 = vunpack.c.l.b16 %v89
    %v128 = vunpack.c.l.b16 %v90
    %v129 = vunpack.c.l.b16 %v91
    %v130 = vunpack.c.l.b16 %v92
    %v131 = vunpack.c.l.b16 %v93
    %v132 = vpack.c.b16 %v117, %v116
    %v133 = vpack.c.b16 %v119, %v118
    %v134 = vpack.c.b16 %v121, %v120
    %v135 = vpack.c.b16 %v123, %v122
    %v136 = vpack.c.b16 %v125, %v124
    %v137 = vpack.c.b16 %v127, %v126
    %v138 = vpack.c.b16 %v129, %v128
    %v139 = vpack.c.b16 %v131, %v130
    %148 = vmatpush.bf16.msra.mxu0 %v139
    %149 = vmatpush.bf16.msra.mxu0 %v138
    %150 = vmatpush.bf16.msra.mxu0 %v137
    %151 = vmatpush.bf16.msra.mxu0 %v136
    %152 = vmatpush.bf16.msra.mxu0 %v135
    %153 = vmatpush.bf16.msra.mxu0 %v134
    %154 = vmatpush.bf16.msra.mxu0 %v133
    %155 = vmatpush.bf16.msra.mxu0 %v132
    %156 = vmatmul.bf16.gmra.mxu0 %v94
    %v157 = vpop.f32.mrf.mxu0
    %v158 = vadd.f32 %v98, %v157
    %v159 = vpop.f32.mrf.mxu0
    %v160 = vadd.f32 %v98, %v159
    %161 = vdwg.mxu0
    %v162 = vmax.f32 %v158, 0.0
    %v163 = vmax.f32 %v160, 0.0
    %s164 = scalar_lea.vmem [#allocation2], 64
    %v165 = vld [vmem:[%s164] sm:$0xf]
    %v166 = vld [vmem:[%s164 + $0x4] sm:$0xf]
    %v167 = vld [vmem:[%s164 + $0x8] sm:$0xf]
    %v168 = vld [vmem:[%s164 + $0xc] sm:$0xf]
    %v169 = vld [vmem:[%s164 + $0x10] sm:$0xf]
    %v170 = vld [vmem:[%s164 + $0x14] sm:$0xf]
    %v171 = vld [vmem:[%s164 + $0x18] sm:$0xf]
    %v172 = vld [vmem:[%s164 + $0x1c] sm:$0xf]
    %v173 = vld [vmem:[%s164 + $0x20] sm:$0xf]
    %v174 = vld [vmem:[%s164 + $0x24] sm:$0xf]
    %v175 = vld [vmem:[%s164 + $0x28] sm:$0xf]
    %v176 = vld [vmem:[%s164 + $0x2c] sm:$0xf]
    %v177 = vld [vmem:[%s164 + $0x30] sm:$0xf]
    %v178 = vld [vmem:[%s164 + $0x34] sm:$0xf]
    %v179 = vld [vmem:[%s164 + $0x38] sm:$0xf]
    %v180 = vld [vmem:[%s164 + $0x3c] sm:$0xf]
    %v181 = vpack.c.bf16 %v163, %v162
    %s182 = scalar_lea.vmem %s3, 2
    %v183 = vld [vmem:[%s182] sm:$0x1]
    %v185 = vperm.slane %v183, 0
    %v203 = vunpack.c.l.b16 %v165
    %v204 = vunpack.c.l.b16 %v166
    %v205 = vunpack.c.l.b16 %v167
    %v206 = vunpack.c.l.b16 %v168
    %v207 = vunpack.c.l.b16 %v169
    %v208 = vunpack.c.l.b16 %v170
    %v209 = vunpack.c.l.b16 %v171
    %v210 = vunpack.c.l.b16 %v172
    %v211 = vunpack.c.l.b16 %v173
    %v212 = vunpack.c.l.b16 %v174
    %v213 = vunpack.c.l.b16 %v175
    %v214 = vunpack.c.l.b16 %v176
    %v215 = vunpack.c.l.b16 %v177
    %v216 = vunpack.c.l.b16 %v178
    %v217 = vunpack.c.l.b16 %v179
    %v218 = vunpack.c.l.b16 %v180
    %v219 = vpack.c.b16 %v204, %v203
    %v220 = vpack.c.b16 %v206, %v205
    %v221 = vpack.c.b16 %v208, %v207
    %v222 = vpack.c.b16 %v210, %v209
    %v223 = vpack.c.b16 %v212, %v211
    %v224 = vpack.c.b16 %v214, %v213
    %v225 = vpack.c.b16 %v216, %v215
    %v226 = vpack.c.b16 %v218, %v217
    %235 = vmatpush.bf16.msra.mxu0 %v226
    %236 = vmatpush.bf16.msra.mxu0 %v225
    %237 = vmatpush.bf16.msra.mxu0 %v224
    %238 = vmatpush.bf16.msra.mxu0 %v223
    %239 = vmatpush.bf16.msra.mxu0 %v222
    %240 = vmatpush.bf16.msra.mxu0 %v221
    %241 = vmatpush.bf16.msra.mxu0 %v220
    %242 = vmatpush.bf16.msra.mxu0 %v219
    %243 = vmatmul.bf16.gmra.mxu0 %v181
    %v244 = vpop.f32.mrf.mxu0
    %v245 = vadd.f32 %v185, %v244
    %v246 = vpop.f32.mrf.mxu0
    %v247 = vadd.f32 %v185, %v246
    %248 = vdwg.mxu0
    %v249 = vtanh.pop %v245
    %v250 = vtanh.pop %v247
    %251 = vst [vmem:[#allocation5] sm:$0xff] %v249
    %252 = vst [vmem:[#allocation5 + $0x8] sm:$0xff] %v250
    // Predicated region
    $region22: #{forward.1} parent=1 // pred_check
      _
    $region23: #{forward.1} parent=1 // pred_check_branch
      %254 = sbr.rel (0) target = $region25
    $region24: #{forward.1} parent=1 // pred_region
      %256 = vsyncadd [#allocation4], 0
      %s257 = sshll.u32 [#allocation5], 4
      %s258 = int_to_ptr.vmem [resolvable:$true] %s257
      %s259 = sshll.u32 %s4, 4
      %s260 = int_to_ptr.hbm [resolvable:$true] %s259
      %265 = dma.vmem_to_hbm [thread:$0]  %s258, 256, %s260, [#allocation4], 128, 128, 8
    $region25: #{forward.1} parent=1 // pred_fallthru
      _
    // Predicated region
    $region26: #{forward.1} parent=1 // pred_check
      _
    $region27: #{forward.1} parent=1 // pred_check_branch
      %267 = sbr.rel (0) target = $region29
    $region28: #{forward.1} parent=1 // pred_region
      %269 = dma.done [#allocation4], 256
    $region29: #{forward.1} parent=1 // pred_fallthru
      _
    %270 = vsyncpa [#allocation3], 1
    %271 = vsyncpa [#allocation4], 1

</llo_original>
